<compile_context>
chip_gen: v7x
topology: tpu7x:2x2x1
jax: 0.10.0
libtpu: 0.0.40
codegen_flags: <defaults>
</compile_context>

<pallas_src>
import jax
import jax.numpy as jnp
from jax.experimental import pallas as pl
from jax.experimental.pallas import tpu as pltpu

INPUT_SIZE = 15
H1 = 128
H2 = 64
OUT = 1

# Batch-tile granularity: full MXU N-width on v6e/v7x, 2 vregs of lanes.
_TB_GRAN = 256
# Default max batch tile (review: 4096-8192 once output is lane-dense & bf16).
DEFAULT_BLOCK_B = 8192


def _round_up(n, m):
    return ((n + m - 1) // m) * m


def _choose_tb(batch, block_b):
    """Pick a batch tile: multiple of 256, >=2 grid steps when possible,
    minimal tail padding."""
    b_r = _round_up(max(batch, 1), _TB_GRAN)
    if b_r <= _TB_GRAN:
        return _TB_GRAN
    # Aim for at least 2 (ideally 4) grid steps so v7x's two TensorCores both
    # get work; never exceed block_b per tile.
    n_tiles = max(min(4, b_r // _TB_GRAN), pl.cdiv(b_r, block_b))
    tb = _round_up(pl.cdiv(b_r, n_tiles), _TB_GRAN)
    return min(tb, block_b)


def pricing_mlp_kernel(xt_ref, w1_ref, b1_ref, w2_ref, b2_ref, w3_ref, b3_ref,
                       o_ref):
    # Layer 1: Linear(15, 128) + ReLU.  (128,15)bf16 @ (15,TB)bf16 -> f32.
    h1 = jnp.dot(w1_ref[...], xt_ref[...],
                 preferred_element_type=jnp.float32)
    h1 = jnp.maximum(h1 + b1_ref[...], 0.0)

    # Dropout(0.3): identity in eval mode.
    # TODO(synk): training-mode dropout not implemented; would need
    #             pltpu.prng_seed + pltpu.stateful_bernoulli with 1/0.7 scale.

    # Layer 2: Linear(128, 64) + ReLU.  (64,128)bf16 @ (128,TB)bf16 -> f32.
    h2 = jnp.dot(w2_ref[...], h1.astype(jnp.bfloat16),
                 preferred_element_type=jnp.float32)
    h2 = jnp.maximum(h2 + b2_ref[...], 0.0)

    # Layer 3: Linear(64, 1) + ReLU.  (1,64)bf16 @ (64,TB)bf16 -> (1,TB) f32,
    # lane-dense result straight onto the output tile; bias is an SMEM scalar.
    h3 = jnp.dot(w3_ref[...], h2.astype(jnp.bfloat16),
                 preferred_element_type=jnp.float32)
    o_ref[...] = jnp.maximum(h3 + b3_ref[0], 0.0).astype(o_ref.dtype)


def pricing_model_forward(x, params, *, block_b=DEFAULT_BLOCK_B):
    """x: (B, INPUT_SIZE) float32.  Returns (B, 1) float32.

    params are in PyTorch nn.Linear layout:
      w1 (128, 15), b1 (128,), w2 (64, 128), b2 (64,), w3 (1, 64), b3 (1,)
    """
    w1, b1, w2, b2, w3, b3 = params
    B = x.shape[0]

    TB = _choose_tb(B, block_b)
    Bp = _round_up(B, TB)
    if Bp != B:
        x = jnp.pad(x, ((0, Bp - B), (0, 0)))

    # Batch on the lane axis: x^T is (15, Bp), streamed in bf16 tiles.
    xt = x.astype(jnp.bfloat16).T

    # One-time bf16 cast of weights (f32 accumulation happens in-kernel);
    # biases stay f32 and are added post-accumulation.
    w1b = w1.astype(jnp.bfloat16)                    # (128, 15)
    w2b = w2.astype(jnp.bfloat16)                    # (64, 128)
    w3b = w3.astype(jnp.bfloat16)                    # (1, 64)
    b1c = b1.reshape(H1, 1).astype(jnp.float32)      # broadcast over lanes
    b2c = b2.reshape(H2, 1).astype(jnp.float32)
    b3c = b3.reshape(OUT).astype(jnp.float32)        # SMEM scalar

    grid = (Bp // TB,)

    param_bytes = sum(int(p.size) * p.dtype.itemsize
                      for p in (w1b, b1c, w2b, b2c, w3b, b3c))
    cost = pl.CostEstimate(
        flops=2 * Bp * (INPUT_SIZE * H1 + H1 * H2 + H2 * OUT),
        transcendentals=0,
        bytes_accessed=Bp * INPUT_SIZE * 2 + Bp * OUT * 4 + param_bytes,
    )

    out = pl.pallas_call(
        pricing_mlp_kernel,
        out_shape=jax.ShapeDtypeStruct((OUT, Bp), jnp.float32),
        grid=grid,
        in_specs=[
            # x^T: tiled along the batch (lane) axis.
            pl.BlockSpec((INPUT_SIZE, TB), lambda i: (0, i)),
            # Weights / biases: same block every step -> VMEM-resident.
            pl.BlockSpec((H1, INPUT_SIZE), lambda i: (0, 0)),
            pl.BlockSpec((H1, 1), lambda i: (0, 0)),
            pl.BlockSpec((H2, H1), lambda i: (0, 0)),
            pl.BlockSpec((H2, 1), lambda i: (0, 0)),
            pl.BlockSpec((OUT, H2), lambda i: (0, 0)),
            # b3: scalar in SMEM (avoids a 128-lane-padded VMEM tile).
            pl.BlockSpec(memory_space=pltpu.MemorySpace.SMEM),
        ],
        # Lane-dense (1, TB) output block.
        out_specs=pl.BlockSpec((OUT, TB), lambda i: (0, i)),
        compiler_params=pltpu.CompilerParams(
            dimension_semantics=("parallel",),
            vmem_limit_bytes=32 << 20,
        ),
        cost_estimate=cost,
    )(xt, w1b, b1c, w2b, b2c, w3b, b3c)

    # (1, Bp) -> (B, 1)
    return out.reshape(Bp, OUT)[:B]


def init_params(key):
    """Deterministic init matching nn.Linear (PyTorch (fan_out, fan_in) layout)."""
    k1, k2, k3, k4, k5, k6 = jax.random.split(key, 6)

    def linear_init(kw, kb, fan_in, fan_out):
        bound = 1.0 / jnp.sqrt(fan_in)
        w = jax.random.uniform(kw, (fan_out, fan_in), jnp.float32, -bound, bound)
        b = jax.random.uniform(kb, (fan_out,), jnp.float32, -bound, bound)
        return w, b

    w1, b1 = linear_init(k1, k2, INPUT_SIZE, H1)   # (128, 15), (128,)
    w2, b2 = linear_init(k3, k4, H1, H2)           # (64, 128), (64,)
    w3, b3 = linear_init(k5, k6, H2, OUT)          # (1, 64),   (1,)
    return (w1, b1, w2, b2, w3, b3)


def reference_forward(x, params):
    """Pure-JAX f32 reference matching the PyTorch module."""
    w1, b1, w2, b2, w3, b3 = params
    h1 = jnp.maximum(x @ w1.T + b1, 0.0)
    h2 = jnp.maximum(h1 @ w2.T + b2, 0.0)
    h3 = h2 @ w3.T + b3
    return jnp.maximum(h3, 0.0)


if __name__ == "__main__":
    key = jax.random.PRNGKey(0)
    kx1, kx2, kx3, kp = jax.random.split(key, 4)
    params = init_params(kp)

    # bf16 MXU operands with f32 accumulation -> relaxed tolerances.
    ATOL = 2e-2
    RTOL = 2e-2

    # Small, even batch.
    B1 = 8
    x1 = jax.random.normal(kx1, (B1, INPUT_SIZE), dtype=jnp.float32)
    out1 = jax.block_until_ready(pricing_model_forward(x1, params))
    ref1 = reference_forward(x1, params)
    assert out1.shape == (B1, OUT), out1.shape
    assert jnp.allclose(out1, ref1, atol=ATOL, rtol=RTOL), "mismatch (B=8)"

    # Ragged batch to exercise tail padding + slicing.
    B2 = 37
    x2 = jax.random.normal(kx2, (B2, INPUT_SIZE), dtype=jnp.float32)
    out2 = jax.block_until_ready(pricing_model_forward(x2, params))
    ref2 = reference_forward(x2, params)
    assert out2.shape == (B2, OUT), out2.shape
    assert jnp.allclose(out2, ref2, atol=ATOL, rtol=RTOL), "mismatch (B=37)"

    # Multi-tile grid (several 256-row tiles) + tail padding.
    B3 = 600
    x3 = jax.random.normal(kx3, (B3, INPUT_SIZE), dtype=jnp.float32)
    out3 = jax.block_until_ready(pricing_model_forward(x3, params))
    ref3 = reference_forward(x3, params)
    assert out3.shape == (B3, OUT), out3.shape
    assert jnp.allclose(out3, ref3, atol=ATOL, rtol=RTOL), "mismatch (B=600)"

    print("KERNEL_OK")
</pallas_src>

<mosaic_0001>
module attributes {stable_mosaic.version = 11 : i64} {
  func.func @pricing_mlp_kernel(%arg0: i32, %arg1: memref<15x256xbf16, #tpu.memory_space<vmem>>, %arg2: memref<128x15xbf16, #tpu.memory_space<vmem>>, %arg3: memref<128x1xf32, #tpu.memory_space<vmem>>, %arg4: memref<64x128xbf16, #tpu.memory_space<vmem>>, %arg5: memref<64x1xf32, #tpu.memory_space<vmem>>, %arg6: memref<1x64xbf16, #tpu.memory_space<vmem>>, %arg7: memref<1xf32, #tpu.memory_space<smem>>, %arg8: memref<1x256xf32, #tpu.memory_space<vmem>>) attributes {dimension_semantics = [#tpu.dimension_semantics<parallel>], iteration_bounds = array<i64: 1>, scalar_prefetch = 0 : i64, scratch_operands = 0 : i64, tpu.core_type = #tpu.core_type<tc>, window_params = [{transform_indices = @transform_0, window_bounds = array<i64: 15, 256>}, {pipeline_mode = #tpu.pipeline_mode<synchronous>, transform_indices = @transform_1, window_bounds = array<i64: 128, 15>}, {pipeline_mode = #tpu.pipeline_mode<synchronous>, transform_indices = @transform_2, window_bounds = array<i64: 128, 1>}, {pipeline_mode = #tpu.pipeline_mode<synchronous>, transform_indices = @transform_3, window_bounds = array<i64: 64, 128>}, {pipeline_mode = #tpu.pipeline_mode<synchronous>, transform_indices = @transform_4, window_bounds = array<i64: 64, 1>}, {pipeline_mode = #tpu.pipeline_mode<synchronous>, transform_indices = @transform_5, window_bounds = array<i64: 1, 64>}, {transform_indices = @transform_6, window_bounds = array<i64: 1>}, {transform_indices = @transform_7, window_bounds = array<i64: 1, 256>}]} {
    %c0 = arith.constant 0 : index
    %c0_0 = arith.constant 0 : index
    %0 = vector.load %arg2[%c0, %c0_0] : memref<128x15xbf16, #tpu.memory_space<vmem>>, vector<128x15xbf16>
    %c0_1 = arith.constant 0 : index
    %c0_2 = arith.constant 0 : index
    %1 = vector.load %arg1[%c0_1, %c0_2] : memref<15x256xbf16, #tpu.memory_space<vmem>>, vector<15x256xbf16>
    %cst = arith.constant dense<0.000000e+00> : vector<128x256xf32>
    %2 = tpu.matmul %0, %1, %cst {dimension_numbers = #tpu.dot_dimension_numbers<[1], [0], [0], [1], [0, 0, 1, 1], [], []>} : vector<128x15xbf16>, vector<15x256xbf16>, vector<128x256xf32> -> vector<128x256xf32>
    %c0_3 = arith.constant 0 : index
    %c0_4 = arith.constant 0 : index
    %3 = vector.load %arg3[%c0_3, %c0_4] : memref<128x1xf32, #tpu.memory_space<vmem>>, vector<128x1xf32>
    %4 = vector.broadcast %3 : vector<128x1xf32> to vector<128x256xf32>
    %5 = arith.addf %2, %4 : vector<128x256xf32>
    %cst_5 = arith.constant 0.000000e+00 : f32
    %6 = vector.broadcast %cst_5 : f32 to vector<128x256xf32>
    %7 = arith.maximumf %5, %6 : vector<128x256xf32>
    %c0_6 = arith.constant 0 : index
    %c0_7 = arith.constant 0 : index
    %8 = vector.load %arg4[%c0_6, %c0_7] : memref<64x128xbf16, #tpu.memory_space<vmem>>, vector<64x128xbf16>
    %9 = arith.truncf %7 : vector<128x256xf32> to vector<128x256xbf16>
    %cst_8 = arith.constant dense<0.000000e+00> : vector<64x256xf32>
    %10 = tpu.matmul %8, %9, %cst_8 {dimension_numbers = #tpu.dot_dimension_numbers<[1], [0], [0], [1], [0, 0, 1, 1], [], []>} : vector<64x128xbf16>, vector<128x256xbf16>, vector<64x256xf32> -> vector<64x256xf32>
    %c0_9 = arith.constant 0 : index
    %c0_10 = arith.constant 0 : index
    %11 = vector.load %arg5[%c0_9, %c0_10] : memref<64x1xf32, #tpu.memory_space<vmem>>, vector<64x1xf32>
    %12 = vector.broadcast %11 : vector<64x1xf32> to vector<64x256xf32>
    %13 = arith.addf %10, %12 : vector<64x256xf32>
    %cst_11 = arith.constant 0.000000e+00 : f32
    %14 = vector.broadcast %cst_11 : f32 to vector<64x256xf32>
    %15 = arith.maximumf %13, %14 : vector<64x256xf32>
    %c0_12 = arith.constant 0 : index
    %c0_13 = arith.constant 0 : index
    %16 = vector.load %arg6[%c0_12, %c0_13] : memref<1x64xbf16, #tpu.memory_space<vmem>>, vector<1x64xbf16>
    %17 = arith.truncf %15 : vector<64x256xf32> to vector<64x256xbf16>
    %cst_14 = arith.constant dense<0.000000e+00> : vector<1x256xf32>
    %18 = tpu.matmul %16, %17, %cst_14 {dimension_numbers = #tpu.dot_dimension_numbers<[1], [0], [0], [1], [0, 0, 1, 1], [], []>} : vector<1x64xbf16>, vector<64x256xbf16>, vector<1x256xf32> -> vector<1x256xf32>
    %c0_15 = arith.constant 0 : index
    %19 = memref.load %arg7[%c0_15] : memref<1xf32, #tpu.memory_space<smem>>
    %20 = vector.broadcast %19 : f32 to vector<1x256xf32>
    %21 = arith.addf %18, %20 : vector<1x256xf32>
    %cst_16 = arith.constant 0.000000e+00 : f32
    %22 = vector.broadcast %cst_16 : f32 to vector<1x256xf32>
    %23 = arith.maximumf %21, %22 : vector<1x256xf32>
    %c0_17 = arith.constant 0 : index
    %c0_18 = arith.constant 0 : index
    %24 = vector.load %arg8[%c0_17, %c0_18] : memref<1x256xf32, #tpu.memory_space<vmem>>, vector<1x256xf32>
    tpu.vector_store %arg8[%c0_17, %c0_18], %23 {strides = array<i32>} : memref<1x256xf32, #tpu.memory_space<vmem>>, vector<1x256xf32>,
    return
  }
  func.func @transform_0(%arg0: i32) -> (i32, i32) {
    %c0_i32 = arith.constant 0 : i32
    %c0_i32_0 = arith.constant 0 : i32
    return %c0_i32, %arg0 : i32, i32
  }
  func.func @transform_1(%arg0: i32) -> (i32, i32) {
    %c0_i32 = arith.constant 0 : i32
    %c0_i32_0 = arith.constant 0 : i32
    %c0_i32_1 = arith.constant 0 : i32
    return %c0_i32, %c0_i32_0 : i32, i32
  }
  func.func @transform_2(%arg0: i32) -> (i32, i32) {
    %c0_i32 = arith.constant 0 : i32
    %c0_i32_0 = arith.constant 0 : i32
    %c0_i32_1 = arith.constant 0 : i32
    return %c0_i32, %c0_i32_0 : i32, i32
  }
  func.func @transform_3(%arg0: i32) -> (i32, i32) {
    %c0_i32 = arith.constant 0 : i32
    %c0_i32_0 = arith.constant 0 : i32
    %c0_i32_1 = arith.constant 0 : i32
    return %c0_i32, %c0_i32_0 : i32, i32
  }
  func.func @transform_4(%arg0: i32) -> (i32, i32) {
    %c0_i32 = arith.constant 0 : i32
    %c0_i32_0 = arith.constant 0 : i32
    %c0_i32_1 = arith.constant 0 : i32
    return %c0_i32, %c0_i32_0 : i32, i32
  }
  func.func @transform_5(%arg0: i32) -> (i32, i32) {
    %c0_i32 = arith.constant 0 : i32
    %c0_i32_0 = arith.constant 0 : i32
    %c0_i32_1 = arith.constant 0 : i32
    return %c0_i32, %c0_i32_0 : i32, i32
  }
  func.func @transform_6(%arg0: i32) -> i32 {
    %c0_i32 = arith.constant 0 : i32
    %c0_i32_0 = arith.constant 0 : i32
    return %c0_i32 : i32
  }
  func.func @transform_7(%arg0: i32) -> (i32, i32) {
    %c0_i32 = arith.constant 0 : i32
    %c0_i32_0 = arith.constant 0 : i32
    return %c0_i32, %arg0 : i32, i32
  }
}

</mosaic_0001>

<llo_original>
// kernel: tpu_custom_call.1
$region0: #{tpu_custom_call.1}
  #allocation0 [shape = 'u32[]', space=smem, size = 0x4, offset = 0x4, fixed_abs, tag = 'smem constant byte address 0x4 - core index']
  #allocation1 [shape = 'u32[144,128]{1,0:T(1,128)}', space=vmem, size = 0x12000, scoped, tag = 'internal scratch']
  #allocation2 [shape = 'f32[1]{0:T(128)S(6)}', space=smem, size = 0x200, scoped, tag = 'scoped memory for tpu_custom_call.1']
  %s0 = inlined_call_operand.vmem [shape: bf16[15,256], index: 0, kind: input, shape index: {}]
  %s1 = inlined_call_operand.vmem [shape: bf16[128,15], index: 1, kind: input, shape index: {}]
  %s2 = inlined_call_operand.vmem [shape: f32[128,1], index: 2, kind: input, shape index: {}]
  %s3 = inlined_call_operand.vmem [shape: bf16[64,128], index: 3, kind: input, shape index: {}]
  %s4 = inlined_call_operand.vmem [shape: f32[64,1], index: 4, kind: input, shape index: {}]
  %s5 = inlined_call_operand.vmem [shape: bf16[1,64], index: 5, kind: input, shape index: {}]
  %s6 = inlined_call_operand.<no memory space> [shape: f32[1], index: 6, kind: input, shape index: {}]
  %s7 = inlined_call_operand.hbm [shape: f32[1,256], index: 7, kind: output, shape index: {}]
  %s8 = sld [smem:[#allocation0]]
  $region38: #{tpu_custom_call.1} parent=0
    _
  %s10 = ssub.s32 1, %s8
  %s11 = scalar_select 0, %s10, %s8
  %12 = sst [smem:[#allocation2]] %s6
  $region1: #{tpu_custom_call.1} parent=0
    #allocation3 [shape = 'u8[1024]{0}', space=vmem, size = 0x400, scoped, tag = 'output window, operand 0, single buffered']
    #allocation4 [shape = 's32[1]{0}', space=sflag, size = 0x4, scoped, tag = 'scoped memory for tpu_custom_call.1']
    %13 = vsyncpa [#allocation4], 0
    // Predicated region
    $region2: #{tpu_custom_call.1} parent=1 // pred_check
      _
    $region3: #{tpu_custom_call.1} parent=1 // pred_check_branch
      %15 = sbr.rel (0) target = $region5
    $region4: #{tpu_custom_call.1} parent=1 // pred_region
      _
    $region5: #{tpu_custom_call.1} parent=1 // pred_fallthru
      _
    // Predicated region
    $region6: #{tpu_custom_call.1} parent=1 // pred_check
      _
    $region7: #{tpu_custom_call.1} parent=1 // pred_check_branch
      %17 = sbr.rel (0) target = $region9
    $region8: #{tpu_custom_call.1} parent=1 // pred_region
      _
    $region9: #{tpu_custom_call.1} parent=1 // pred_fallthru
      _
    // Predicated region
    $region10: #{tpu_custom_call.1} parent=1 // pred_check
      _
    $region11: #{tpu_custom_call.1} parent=1 // pred_check_branch
      %19 = sbr.rel (0) target = $region13
    $region12: #{tpu_custom_call.1} parent=1 // pred_region
      _
    $region13: #{tpu_custom_call.1} parent=1 // pred_fallthru
      _
    // Predicated region
    $region14: #{tpu_custom_call.1} parent=1 // pred_check
      _
    $region15: #{tpu_custom_call.1} parent=1 // pred_check_branch
      %21 = sbr.rel (0) target = $region17
    $region16: #{tpu_custom_call.1} parent=1 // pred_region
      _
    $region17: #{tpu_custom_call.1} parent=1 // pred_fallthru
      _
    // Predicated region
    $region18: #{tpu_custom_call.1} parent=1 // pred_check
      _
    $region19: #{tpu_custom_call.1} parent=1 // pred_check_branch
      %23 = sbr.rel (0) target = $region21
    $region20: #{tpu_custom_call.1} parent=1 // pred_region
      _
    $region21: #{tpu_custom_call.1} parent=1 // pred_fallthru
      _
    // Predicated region
    $region22: #{tpu_custom_call.1} parent=1 // pred_check
      _
    $region23: #{tpu_custom_call.1} parent=1 // pred_check_branch
      %25 = sbr.rel (0) target = $region25
    $region24: #{tpu_custom_call.1} parent=1 // pred_region
      _
    $region25: #{tpu_custom_call.1} parent=1 // pred_fallthru
      _
    // Predicated region
    $region26: #{tpu_custom_call.1} parent=1 // pred_check
      _
    $region27: #{tpu_custom_call.1} parent=1 // pred_check_branch
      %27 = sbr.rel (0) target = $region29
    $region28: #{tpu_custom_call.1} parent=1 // pred_region
      _
    $region29: #{tpu_custom_call.1} parent=1 // pred_fallthru
      _
    %v29 = vld [vmem:[%s1] sm:$0xf]
    %v30 = vld [vmem:[%s1 + $0x4] sm:$0xf]
    %v31 = vld [vmem:[%s1 + $0x8] sm:$0xf]
    %v32 = vld [vmem:[%s1 + $0xc] sm:$0xf]
    %v33 = vld [vmem:[%s1 + $0x10] sm:$0xf]
    %v34 = vld [vmem:[%s1 + $0x14] sm:$0xf]
    %v35 = vld [vmem:[%s1 + $0x18] sm:$0xf]
    %v36 = vld [vmem:[%s1 + $0x1c] sm:$0xf]
    %v37 = vld [vmem:[%s1 + $0x20] sm:$0xf]
    %v38 = vld [vmem:[%s1 + $0x24] sm:$0xf]
    %v39 = vld [vmem:[%s1 + $0x28] sm:$0xf]
    %v40 = vld [vmem:[%s1 + $0x2c] sm:$0xf]
    %v41 = vld [vmem:[%s1 + $0x30] sm:$0xf]
    %v42 = vld [vmem:[%s1 + $0x34] sm:$0xf]
    %v43 = vld [vmem:[%s1 + $0x38] sm:$0xf]
    %v44 = vld [vmem:[%s1 + $0x3c] sm:$0xf]
    %v45 = vld [vmem:[%s0] sm:$0xff]
    %v46 = vld [vmem:[%s0 + $0x8] sm:$0xff]
    %v47 = vld [vmem:[%s2] sm:$0xff]
    %v48 = vld [vmem:[%s2 + $0x8] sm:$0xff]
    %v49 = vld [vmem:[%s2 + $0x10] sm:$0xff]
    %v50 = vld [vmem:[%s2 + $0x18] sm:$0xff]
    %v51 = vld [vmem:[%s2 + $0x20] sm:$0xff]
    %v52 = vld [vmem:[%s2 + $0x28] sm:$0xff]
    %v53 = vld [vmem:[%s2 + $0x30] sm:$0xff]
    %v54 = vld [vmem:[%s2 + $0x38] sm:$0xff]
    %v55 = vld [vmem:[%s2 + $0x40] sm:$0xff]
    %v56 = vld [vmem:[%s2 + $0x48] sm:$0xff]
    %v57 = vld [vmem:[%s2 + $0x50] sm:$0xff]
    %v58 = vld [vmem:[%s2 + $0x58] sm:$0xff]
    %v59 = vld [vmem:[%s2 + $0x60] sm:$0xff]
    %v60 = vld [vmem:[%s2 + $0x68] sm:$0xff]
    %v61 = vld [vmem:[%s2 + $0x70] sm:$0xff]
    %v62 = vld [vmem:[%s2 + $0x78] sm:$0xff]
    %64 = vset.pattern.permute.xlu0 0
    %65 = vperm.xlu0 %64, %v47
    %v66 = vpop.permute.xlu0 %65
    %69 = vset.pattern.permute.xlu0 0
    %70 = vperm.xlu0 %69, %v48
    %v71 = vpop.permute.xlu0 %70
    %74 = vset.pattern.permute.xlu0 0
    %75 = vperm.xlu0 %74, %v49
    %v76 = vpop.permute.xlu0 %75
    %79 = vset.pattern.permute.xlu0 0
    %80 = vperm.xlu0 %79, %v50
    %v81 = vpop.permute.xlu0 %80
    %84 = vset.pattern.permute.xlu0 0
    %85 = vperm.xlu0 %84, %v51
    %v86 = vpop.permute.xlu0 %85
    %89 = vset.pattern.permute.xlu0 0
    %90 = vperm.xlu0 %89, %v52
    %v91 = vpop.permute.xlu0 %90
    %94 = vset.pattern.permute.xlu0 0
    %95 = vperm.xlu0 %94, %v53
    %v96 = vpop.permute.xlu0 %95
    %99 = vset.pattern.permute.xlu0 0
    %100 = vperm.xlu0 %99, %v54
    %v101 = vpop.permute.xlu0 %100
    %104 = vset.pattern.permute.xlu0 0
    %105 = vperm.xlu0 %104, %v55
    %v106 = vpop.permute.xlu0 %105
    %109 = vset.pattern.permute.xlu0 0
    %110 = vperm.xlu0 %109, %v56
    %v111 = vpop.permute.xlu0 %110
    %114 = vset.pattern.permute.xlu0 0
    %115 = vperm.xlu0 %114, %v57
    %v116 = vpop.permute.xlu0 %115
    %119 = vset.pattern.permute.xlu0 0
    %120 = vperm.xlu0 %119, %v58
    %v121 = vpop.permute.xlu0 %120
    %124 = vset.pattern.permute.xlu0 0
    %125 = vperm.xlu0 %124, %v59
    %v126 = vpop.permute.xlu0 %125
    %129 = vset.pattern.permute.xlu0 0
    %130 = vperm.xlu0 %129, %v60
    %v131 = vpop.permute.xlu0 %130
    %134 = vset.pattern.permute.xlu0 0
    %135 = vperm.xlu0 %134, %v61
    %v136 = vpop.permute.xlu0 %135
    %139 = vset.pattern.permute.xlu0 0
    %140 = vperm.xlu0 %139, %v62
    %v141 = vpop.permute.xlu0 %140
    %v159 = vunpack.c.l.b16 %v29
    %v160 = vunpack.c.l.b16 %v30
    %v161 = vunpack.c.l.b16 %v31
    %v162 = vunpack.c.l.b16 %v32
    %v163 = vunpack.c.l.b16 %v33
    %v164 = vunpack.c.l.b16 %v34
    %v165 = vunpack.c.l.b16 %v35
    %v166 = vunpack.c.l.b16 %v36
    %v167 = vunpack.c.l.b16 %v37
    %v168 = vunpack.c.l.b16 %v38
    %v169 = vunpack.c.l.b16 %v39
    %v170 = vunpack.c.l.b16 %v40
    %v171 = vunpack.c.l.b16 %v41
    %v172 = vunpack.c.l.b16 %v42
    %v173 = vunpack.c.l.b16 %v43
    %v174 = vunpack.c.l.b16 %v44
    %v175 = vpack.c.b16 %v160, %v159
    %v176 = vpack.c.b16 %v162, %v161
    %v177 = vpack.c.b16 %v164, %v163
    %v178 = vpack.c.b16 %v166, %v165
    %v179 = vpack.c.b16 %v168, %v167
    %v180 = vpack.c.b16 %v170, %v169
    %v181 = vpack.c.b16 %v172, %v171
    %v182 = vpack.c.b16 %v174, %v173
    %v185 = vunpack.c.l.b16 %v45
    %v186 = vunpack.c.h.b16 %v45
    %v187 = vunpack.c.l.b16 %v46
    %v188 = vunpack.c.h.b16 %v46
    %v189 = vpack.c.b16 %v187, %v185
    %v190 = vpack.c.b16 %v188, %v186
    %vm191 = vcmask 121856
    %v193 = vsel %vm191, %v175, 0
    %v196 = vsel %vm191, %v176, 0
    %v199 = vsel %vm191, %v177, 0
    %v202 = vsel %vm191, %v178, 0
    %v205 = vsel %vm191, %v179, 0
    %v208 = vsel %vm191, %v180, 0
    %v211 = vsel %vm191, %v181, 0
    %v214 = vsel %vm191, %v182, 0
    %vm216 = vcmask 1046528
    %vm217 = vcmask 1047552
    %v218 = vsel %vm216, 4294967295, 65535
    %v219 = vsel %vm217, %v218, 0
    %v221 = vand.u32 %v189, %v219
    %v224 = vand.u32 %v190, %v219
    %226 = vmatprep.subr.bf16.mxu0 %v224
    %227 = vmatpush1.bf16.msra.mxu0 %v221
    %228 = vmatprep.subr.bf16.mxu0 0
    %229 = vmatpush1.bf16.msra.mxu0 0
    %230 = vmatprep.subr.bf16.mxu0 0
    %231 = vmatpush1.bf16.msra.mxu0 0
    %232 = vmatprep.subr.bf16.mxu0 0
    %233 = vmatpush1.bf16.msra.mxu0 0
    %234 = vmatprep.subr.bf16.mxu0 0
    %235 = vmatpush1.bf16.msra.mxu0 0
    %236 = vmatprep.subr.bf16.mxu0 0
    %237 = vmatpush1.bf16.msra.mxu0 0
    %238 = vmatprep.subr.bf16.mxu0 0
    %239 = vmatpush1.bf16.msra.mxu0 0
    %240 = vmatprep.subr.bf16.mxu0 0
    %241 = vmatpush1.bf16.msra.mxu0 0
    %242 = vmatprep.subr.bf16.mxu0 0
    %243 = vmatpush1.bf16.msra.mxu0 0
    %244 = vmatprep.subr.bf16.mxu0 0
    %245 = vmatpush1.bf16.msra.mxu0 0
    %246 = vmatprep.subr.bf16.mxu0 0
    %247 = vmatpush1.bf16.msra.mxu0 0
    %248 = vmatprep.subr.bf16.mxu0 0
    %249 = vmatpush1.bf16.msra.mxu0 0
    %250 = vmatprep.subr.bf16.mxu0 0
    %251 = vmatpush1.bf16.msra.mxu0 0
    %252 = vmatprep.subr.bf16.mxu0 0
    %253 = vmatpush1.bf16.msra.mxu0 0
    %254 = vmatprep.subr.bf16.mxu0 0
    %255 = vmatpush1.bf16.msra.mxu0 0
    %256 = vmatprep.subr.bf16.mxu0 0
    %257 = vmatpush1.bf16.msra.mxu0 0
    %258 = vmatprep.mubr.bf16.mxu0 0
    %259 = vmatmul.mubr.bf16.gmra.mrb[0].mxu0 %v193
    %v260 = vpop.f32.mrb[0].mxu0
    %v261 = vadd.f32 %v66, %v260
    %v262 = vpop.f32.mrb[0].mxu0
    %v263 = vadd.f32 %v66, %v262
    %v264 = vpop.f32.mrb[0].mxu0
    %v265 = vadd.f32 %v71, %v264
    %v266 = vpop.f32.mrb[0].mxu0
    %v267 = vadd.f32 %v71, %v266
    %268 = vmatprep.mubr.bf16.mxu0 0
    %269 = vmatmul.mubr.bf16.gmra.mrb[0].mxu0 %v196
    %v270 = vpop.f32.mrb[0].mxu0
    %v271 = vadd.f32 %v76, %v270
    %v272 = vpop.f32.mrb[0].mxu0
    %v273 = vadd.f32 %v76, %v272
    %v274 = vpop.f32.mrb[0].mxu0
    %v275 = vadd.f32 %v81, %v274
    %v276 = vpop.f32.mrb[0].mxu0
    %v277 = vadd.f32 %v81, %v276
    %278 = vmatprep.mubr.bf16.mxu0 0
    %279 = vmatmul.mubr.bf16.gmra.mrb[0].mxu0 %v199
    %v280 = vpop.f32.mrb[0].mxu0
    %v281 = vadd.f32 %v86, %v280
    %v282 = vpop.f32.mrb[0].mxu0
    %v283 = vadd.f32 %v86, %v282
    %v284 = vpop.f32.mrb[0].mxu0
    %v285 = vadd.f32 %v91, %v284
    %v286 = vpop.f32.mrb[0].mxu0
    %v287 = vadd.f32 %v91, %v286
    %288 = vmatprep.mubr.bf16.mxu0 0
    %289 = vmatmul.mubr.bf16.gmra.mrb[0].mxu0 %v202
    %v290 = vpop.f32.mrb[0].mxu0
    %v291 = vadd.f32 %v96, %v290
    %v292 = vpop.f32.mrb[0].mxu0
    %v293 = vadd.f32 %v96, %v292
    %v294 = vpop.f32.mrb[0].mxu0
    %v295 = vadd.f32 %v101, %v294
    %v296 = vpop.f32.mrb[0].mxu0
    %v297 = vadd.f32 %v101, %v296
    %298 = vmatprep.mubr.bf16.mxu0 0
    %299 = vmatmul.mubr.bf16.gmra.mrb[0].mxu0 %v205
    %v300 = vpop.f32.mrb[0].mxu0
    %v301 = vadd.f32 %v106, %v300
    %v302 = vpop.f32.mrb[0].mxu0
    %v303 = vadd.f32 %v106, %v302
    %v304 = vpop.f32.mrb[0].mxu0
    %v305 = vadd.f32 %v111, %v304
    %v306 = vpop.f32.mrb[0].mxu0
    %v307 = vadd.f32 %v111, %v306
    %308 = vmatprep.mubr.bf16.mxu0 0
    %309 = vmatmul.mubr.bf16.gmra.mrb[0].mxu0 %v208
    %v310 = vpop.f32.mrb[0].mxu0
    %v311 = vadd.f32 %v116, %v310
    %v312 = vpop.f32.mrb[0].mxu0
    %v313 = vadd.f32 %v116, %v312
    %v314 = vpop.f32.mrb[0].mxu0
    %v315 = vadd.f32 %v121, %v314
    %v316 = vpop.f32.mrb[0].mxu0
    %v317 = vadd.f32 %v121, %v316
    %318 = vmatprep.mubr.bf16.mxu0 0
    %319 = vmatmul.mubr.bf16.gmra.mrb[0].mxu0 %v211
    %v320 = vpop.f32.mrb[0].mxu0
    %v321 = vadd.f32 %v126, %v320
    %v322 = vpop.f32.mrb[0].mxu0
    %v323 = vadd.f32 %v126, %v322
    %v324 = vpop.f32.mrb[0].mxu0
    %v325 = vadd.f32 %v131, %v324
    %v326 = vpop.f32.mrb[0].mxu0
    %v327 = vadd.f32 %v131, %v326
    %328 = vmatprep.mubr.bf16.mxu0 0
    %329 = vmatmul.mubr.bf16.gmra.mrb[0].mxu0 %v214
    %v330 = vpop.f32.mrb[0].mxu0
    %v331 = vadd.f32 %v136, %v330
    %v332 = vpop.f32.mrb[0].mxu0
    %v333 = vadd.f32 %v136, %v332
    %v334 = vpop.f32.mrb[0].mxu0
    %v335 = vadd.f32 %v141, %v334
    %v336 = vpop.f32.mrb[0].mxu0
    %v337 = vadd.f32 %v141, %v336
    %338 = vdwg.mxu0
    %v339 = vmax.f32 %v261, 0.0
    %v340 = vmax.f32 %v263, 0.0
    %v341 = vmax.f32 %v265, 0.0
    %v342 = vmax.f32 %v267, 0.0
    %v343 = vmax.f32 %v271, 0.0
    %v344 = vmax.f32 %v273, 0.0
    %v345 = vmax.f32 %v275, 0.0
    %v346 = vmax.f32 %v277, 0.0
    %v347 = vmax.f32 %v281, 0.0
    %v348 = vmax.f32 %v283, 0.0
    %v349 = vmax.f32 %v285, 0.0
    %v350 = vmax.f32 %v287, 0.0
    %v351 = vmax.f32 %v291, 0.0
    %v352 = vmax.f32 %v293, 0.0
    %v353 = vmax.f32 %v295, 0.0
    %v354 = vmax.f32 %v297, 0.0
    %v355 = vmax.f32 %v301, 0.0
    %v356 = vmax.f32 %v303, 0.0
    %v357 = vmax.f32 %v305, 0.0
    %v358 = vmax.f32 %v307, 0.0
    %v359 = vmax.f32 %v311, 0.0
    %v360 = vmax.f32 %v313, 0.0
    %v361 = vmax.f32 %v315, 0.0
    %v362 = vmax.f32 %v317, 0.0
    %v363 = vmax.f32 %v321, 0.0
    %v364 = vmax.f32 %v323, 0.0
    %v365 = vmax.f32 %v325, 0.0
    %v366 = vmax.f32 %v327, 0.0
    %v367 = vmax.f32 %v331, 0.0
    %v368 = vmax.f32 %v333, 0.0
    %v369 = vmax.f32 %v335, 0.0
    %v370 = vmax.f32 %v337, 0.0
    %v371 = vld [vmem:[%s3] sm:$0xf]
    %v372 = vld [vmem:[%s3 + $0x4] sm:$0xf]
    %v373 = vld [vmem:[%s3 + $0x8] sm:$0xf]
    %v374 = vld [vmem:[%s3 + $0xc] sm:$0xf]
    %v375 = vld [vmem:[%s3 + $0x10] sm:$0xf]
    %v376 = vld [vmem:[%s3 + $0x14] sm:$0xf]
    %v377 = vld [vmem:[%s3 + $0x18] sm:$0xf]
    %v378 = vld [vmem:[%s3 + $0x1c] sm:$0xf]
    %v379 = vpack.c.bf16 %v341, %v339
    %v380 = vpack.c.bf16 %v342, %v340
    %v381 = vpack.c.bf16 %v345, %v343
    %v382 = vpack.c.bf16 %v346, %v344
    %v383 = vpack.c.bf16 %v349, %v347
    %v384 = vpack.c.bf16 %v350, %v348
    %v385 = vpack.c.bf16 %v353, %v351
    %v386 = vpack.c.bf16 %v354, %v352
    %v387 = vpack.c.bf16 %v357, %v355
    %v388 = vpack.c.bf16 %v358, %v356
    %v389 = vpack.c.bf16 %v361, %v359
    %v390 = vpack.c.bf16 %v362, %v360
    %v391 = vpack.c.bf16 %v365, %v363
    %v392 = vpack.c.bf16 %v366, %v364
    %v393 = vpack.c.bf16 %v369, %v367
    %v394 = vpack.c.bf16 %v370, %v368
    %v395 = vld [vmem:[%s4] sm:$0xff]
    %v396 = vld [vmem:[%s4 + $0x8] sm:$0xff]
    %v397 = vld [vmem:[%s4 + $0x10] sm:$0xff]
    %v398 = vld [vmem:[%s4 + $0x18] sm:$0xff]
    %v399 = vld [vmem:[%s4 + $0x20] sm:$0xff]
    %v400 = vld [vmem:[%s4 + $0x28] sm:$0xff]
    %v401 = vld [vmem:[%s4 + $0x30] sm:$0xff]
    %v402 = vld [vmem:[%s4 + $0x38] sm:$0xff]
    %404 = vset.pattern.permute.xlu0 0
    %405 = vperm.xlu0 %404, %v395
    %v406 = vpop.permute.xlu0 %405
    %409 = vset.pattern.permute.xlu0 0
    %410 = vperm.xlu0 %409, %v396
    %v411 = vpop.permute.xlu0 %410
    %414 = vset.pattern.permute.xlu0 0
    %415 = vperm.xlu0 %414, %v397
    %v416 = vpop.permute.xlu0 %415
    %419 = vset.pattern.permute.xlu0 0
    %420 = vperm.xlu0 %419, %v398
    %v421 = vpop.permute.xlu0 %420
    %424 = vset.pattern.permute.xlu0 0
    %425 = vperm.xlu0 %424, %v399
    %v426 = vpop.permute.xlu0 %425
    %429 = vset.pattern.permute.xlu0 0
    %430 = vperm.xlu0 %429, %v400
    %v431 = vpop.permute.xlu0 %430
    %434 = vset.pattern.permute.xlu0 0
    %435 = vperm.xlu0 %434, %v401
    %v436 = vpop.permute.xlu0 %435
    %439 = vset.pattern.permute.xlu0 0
    %440 = vperm.xlu0 %439, %v402
    %v441 = vpop.permute.xlu0 %440
    %v451 = vunpack.c.l.b16 %v371
    %v452 = vunpack.c.l.b16 %v372
    %v453 = vunpack.c.l.b16 %v373
    %v454 = vunpack.c.l.b16 %v374
    %v455 = vunpack.c.l.b16 %v375
    %v456 = vunpack.c.l.b16 %v376
    %v457 = vunpack.c.l.b16 %v377
    %v458 = vunpack.c.l.b16 %v378
    %v459 = vpack.c.b16 %v452, %v451
    %v460 = vpack.c.b16 %v454, %v453
    %v461 = vpack.c.b16 %v456, %v455
    %v462 = vpack.c.b16 %v458, %v457
    %467 = vmatprep.subr.bf16.mxu0 %v380
    %468 = vmatpush1.bf16.msra.mxu0 %v379
    %469 = vmatprep.subr.bf16.mxu0 %v382
    %470 = vmatpush1.bf16.msra.mxu0 %v381
    %471 = vmatprep.subr.bf16.mxu0 %v384
    %472 = vmatpush1.bf16.msra.mxu0 %v383
    %473 = vmatprep.subr.bf16.mxu0 %v386
    %474 = vmatpush1.bf16.msra.mxu0 %v385
    %475 = vmatprep.subr.bf16.mxu0 %v388
    %476 = vmatpush1.bf16.msra.mxu0 %v387
    %477 = vmatprep.subr.bf16.mxu0 %v390
    %478 = vmatpush1.bf16.msra.mxu0 %v389
    %479 = vmatprep.subr.bf16.mxu0 %v392
    %480 = vmatpush1.bf16.msra.mxu0 %v391
    %481 = vmatprep.subr.bf16.mxu0 %v394
    %482 = vmatpush1.bf16.msra.mxu0 %v393
    %483 = vmatprep.subr.bf16.mxu0 0
    %484 = vmatpush1.bf16.msra.mxu0 0
    %485 = vmatprep.subr.bf16.mxu0 0
    %486 = vmatpush1.bf16.msra.mxu0 0
    %487 = vmatprep.subr.bf16.mxu0 0
    %488 = vmatpush1.bf16.msra.mxu0 0
    %489 = vmatprep.subr.bf16.mxu0 0
    %490 = vmatpush1.bf16.msra.mxu0 0
    %491 = vmatprep.subr.bf16.mxu0 0
    %492 = vmatpush1.bf16.msra.mxu0 0
    %493 = vmatprep.subr.bf16.mxu0 0
    %494 = vmatpush1.bf16.msra.mxu0 0
    %495 = vmatprep.subr.bf16.mxu0 0
    %496 = vmatpush1.bf16.msra.mxu0 0
    %497 = vmatprep.subr.bf16.mxu0 0
    %498 = vmatpush1.bf16.msra.mxu0 0
    %499 = vmatprep.mubr.bf16.mxu0 0
    %500 = vmatmul.mubr.bf16.gmra.mrb[0].mxu0 %v459
    %v501 = vpop.f32.mrb[0].mxu0
    %v502 = vadd.f32 %v406, %v501
    %v503 = vpop.f32.mrb[0].mxu0
    %v504 = vadd.f32 %v406, %v503
    %v505 = vpop.f32.mrb[0].mxu0
    %v506 = vadd.f32 %v411, %v505
    %v507 = vpop.f32.mrb[0].mxu0
    %v508 = vadd.f32 %v411, %v507
    %509 = vmatprep.mubr.bf16.mxu0 0
    %510 = vmatmul.mubr.bf16.gmra.mrb[0].mxu0 %v460
    %v511 = vpop.f32.mrb[0].mxu0
    %v512 = vadd.f32 %v416, %v511
    %v513 = vpop.f32.mrb[0].mxu0
    %v514 = vadd.f32 %v416, %v513
    %v515 = vpop.f32.mrb[0].mxu0
    %v516 = vadd.f32 %v421, %v515
    %v517 = vpop.f32.mrb[0].mxu0
    %v518 = vadd.f32 %v421, %v517
    %519 = vmatprep.mubr.bf16.mxu0 0
    %520 = vmatmul.mubr.bf16.gmra.mrb[0].mxu0 %v461
    %v521 = vpop.f32.mrb[0].mxu0
    %v522 = vadd.f32 %v426, %v521
    %v523 = vpop.f32.mrb[0].mxu0
    %v524 = vadd.f32 %v426, %v523
    %v525 = vpop.f32.mrb[0].mxu0
    %v526 = vadd.f32 %v431, %v525
    %v527 = vpop.f32.mrb[0].mxu0
    %v528 = vadd.f32 %v431, %v527
    %529 = vmatprep.mubr.bf16.mxu0 0
    %530 = vmatmul.mubr.bf16.gmra.mrb[0].mxu0 %v462
    %v531 = vpop.f32.mrb[0].mxu0
    %v532 = vadd.f32 %v436, %v531
    %v533 = vpop.f32.mrb[0].mxu0
    %v534 = vadd.f32 %v436, %v533
    %v535 = vpop.f32.mrb[0].mxu0
    %v536 = vadd.f32 %v441, %v535
    %v537 = vpop.f32.mrb[0].mxu0
    %v538 = vadd.f32 %v441, %v537
    %539 = vdwg.mxu0
    %v540 = vmax.f32 %v502, 0.0
    %v541 = vmax.f32 %v504, 0.0
    %v542 = vmax.f32 %v506, 0.0
    %v543 = vmax.f32 %v508, 0.0
    %v544 = vmax.f32 %v512, 0.0
    %v545 = vmax.f32 %v514, 0.0
    %v546 = vmax.f32 %v516, 0.0
    %v547 = vmax.f32 %v518, 0.0
    %v548 = vmax.f32 %v522, 0.0
    %v549 = vmax.f32 %v524, 0.0
    %v550 = vmax.f32 %v526, 0.0
    %v551 = vmax.f32 %v528, 0.0
    %v552 = vmax.f32 %v532, 0.0
    %v553 = vmax.f32 %v534, 0.0
    %v554 = vmax.f32 %v536, 0.0
    %v555 = vmax.f32 %v538, 0.0
    %v556 = vld [vmem:[%s5] sm:$0x1]
    %v557 = vpack.c.bf16 %v542, %v540
    %v558 = vpack.c.bf16 %v543, %v541
    %v559 = vpack.c.bf16 %v546, %v544
    %v560 = vpack.c.bf16 %v547, %v545
    %v561 = vpack.c.bf16 %v550, %v548
    %v562 = vpack.c.bf16 %v551, %v549
    %v563 = vpack.c.bf16 %v554, %v552
    %v564 = vpack.c.bf16 %v555, %v553
    %s565 = sld [smem:[#allocation2]]
    %v566 = vstv %s565
    %vm567 = vcmask 523264
    %v569 = vsel %vm567, %v556, 0
    %571 = vmatprep.subr.bf16.mxu0 %v558
    %572 = vmatpush1.bf16.msra.mxu0 %v557
    %573 = vmatprep.subr.bf16.mxu0 %v560
    %574 = vmatpush1.bf16.msra.mxu0 %v559
    %575 = vmatprep.subr.bf16.mxu0 %v562
    %576 = vmatpush1.bf16.msra.mxu0 %v561
    %577 = vmatprep.subr.bf16.mxu0 %v564
    %578 = vmatpush1.bf16.msra.mxu0 %v563
    %579 = vmatprep.subr.bf16.mxu0 0
    %580 = vmatpush1.bf16.msra.mxu0 0
    %581 = vmatprep.subr.bf16.mxu0 0
    %582 = vmatpush1.bf16.msra.mxu0 0
    %583 = vmatprep.subr.bf16.mxu0 0
    %584 = vmatpush1.bf16.msra.mxu0 0
    %585 = vmatprep.subr.bf16.mxu0 0
    %586 = vmatpush1.bf16.msra.mxu0 0
    %587 = vmatprep.subr.bf16.mxu0 0
    %588 = vmatpush1.bf16.msra.mxu0 0
    %589 = vmatprep.subr.bf16.mxu0 0
    %590 = vmatpush1.bf16.msra.mxu0 0
    %591 = vmatprep.subr.bf16.mxu0 0
    %592 = vmatpush1.bf16.msra.mxu0 0
    %593 = vmatprep.subr.bf16.mxu0 0
    %594 = vmatpush1.bf16.msra.mxu0 0
    %595 = vmatprep.subr.bf16.mxu0 0
    %596 = vmatpush1.bf16.msra.mxu0 0
    %597 = vmatprep.subr.bf16.mxu0 0
    %598 = vmatpush1.bf16.msra.mxu0 0
    %599 = vmatprep.subr.bf16.mxu0 0
    %600 = vmatpush1.bf16.msra.mxu0 0
    %601 = vmatprep.subr.bf16.mxu0 0
    %602 = vmatpush1.bf16.msra.mxu0 0
    %603 = vmatprep.mubr.bf16.mxu0 0
    %604 = vmatmul.mubr.bf16.gmra.mrb[0].mxu0 %v569
    %v605 = vpop.f32.mrb[0].mxu0
    %v606 = vadd.f32 %v566, %v605
    %v607 = vpop.f32.mrb[0].mxu0
    %v608 = vadd.f32 %v566, %v607
    %v609 = vpop.f32.mrb[0].mxu0
    %v610 = vpop.f32.mrb[0].mxu0
    %611 = vdwg.mxu0
    %v612 = vmax.f32 %v606, 0.0
    %v613 = vmax.f32 %v608, 0.0
    %v616 = vcombine.low %v612, %v613
    %v618 = vunpack.c.l.s4 1966171168
    %v619 = vunpack.c.0.s8 %v618
    %v620 = vlaneseq
    %v621 = vshrl.u32 %v620, 7
    %v622 = vsub.s32 %v619, %v621
    %v623 = vrot.slane %v616, %v622
    %v625 = vunpack.c.l.s4 1966171168
    %v626 = vunpack.c.0.s8 %v625
    %v627 = vlaneseq
    %v628 = vshrl.u32 %v627, 7
    %v629 = vsub.s32 %v626, %v628
    %v630 = vrot.slane %v623, %v629
    %v632 = vlaneseq
    %vm633 = vcmp.ge.s32.totalorder %v632, 0
    %vm634 = vcmp.lt.s32.totalorder %v632, 256
    %vm635 = vmand %vm633, %vm634
    %636 = vst.msk [vmem:[#allocation3] sm:$0x3] %vm635, %v630
    // Predicated region
    $region30: #{tpu_custom_call.1} parent=1 // pred_check
      _
    $region31: #{tpu_custom_call.1} parent=1 // pred_check_branch
      %638 = sbr.rel (0) target = $region33
    $region32: #{tpu_custom_call.1} parent=1 // pred_region
      %s640 = ssub.s32 32, 32
      %641 = vsyncadd [#allocation4], %s640
      %s643 = sshll.u32 [#allocation3], 4
      %s644 = int_to_ptr.vmem [resolvable:$true] %s643
      %646 = dma.vmem_to_hbm [thread:$0]  %s644, 32, %s7, [#allocation4]
    $region33: #{tpu_custom_call.1} parent=1 // pred_fallthru
      _
    // Predicated region
    $region34: #{tpu_custom_call.1} parent=1 // pred_check
      _
    $region35: #{tpu_custom_call.1} parent=1 // pred_check_branch
      %648 = sbr.rel (0) target = $region37
    $region36: #{tpu_custom_call.1} parent=1 // pred_region
      %649 = dma.done [#allocation4], 32
    $region37: #{tpu_custom_call.1} parent=1 // pred_fallthru
      _
    %650 = vsyncpa [#allocation4], 1

</llo_original>
